<compile_context>
chip_gen: v5e
topology: v5e:2x2
jax: 0.10.0
libtpu: 0.0.40
codegen_flags: <defaults>
</compile_context>

<pallas_src>
import math

import jax
import jax.numpy as jnp
import numpy as np
from jax.experimental import pallas as pl
from jax.experimental.pallas import tpu as pltpu  # noqa: F401  (TPU backend hooks)

# ----------------------------- configuration ------------------------------
NHEAD = 4
BATCH = 2
SEQ = 8
FEAT = 16     # feature_size
HID = 32      # hidden_dim (embed_dim of the MHA)
HEAD_DIM = HID // NHEAD
LANES = 128   # lane-dense width for weights / output


# --------------------- packed-constants slab layout ------------------------
def _const_layout(feat, hid, batch, seq, nhead):
    rows = batch * seq               # query rows (B*S)
    cols = nhead * batch * seq       # score columns, head-major (h, b, s)
    r_wo = feat                      # out-projection weight rows
    r_bias = feat + hid              # bias rows (row +0: qkv bias, +1: out bias)
    r_hmask = r_bias + 8             # block-diagonal head mask rows
    r_bmask = r_hmask + cols         # additive cross-batch mask rows
    total = r_bmask + rows
    total = ((total + 7) // 8) * 8   # keep sublane-tile aligned
    return rows, cols, r_wo, r_bias, r_hmask, r_bmask, total


# ------------------------------- kernel -----------------------------------
def make_attention_kernel(batch, seq, nhead, hid, feat):
    rows, cols, r_wo, r_bias, r_hmask, r_bmask, _ = _const_layout(
        feat, hid, batch, seq, nhead)

    def kernel(x_ref, c_ref, out_ref):
        # x:   (rows, feat)
        # c:   (total, 128) packed constants slab (weights / biases / masks)
        # out: (rows, 128)  lane-dense (only lanes 0:hid meaningful)
        x = x_ref[...]

        # Fused, pre-folded QKV projection: one MXU push, 128 output lanes.
        # Lanes 96:128 of the weight & bias are zero, so they stay exactly 0.
        qkv = (jnp.dot(x, c_ref[0:feat, :], preferred_element_type=jnp.float32)
               + c_ref[r_bias:r_bias + 1, :])                        # (rows, 128)
        q = qkv[:, 0:hid]                 # q already scaled by 1/sqrt(head_dim)
        k = qkv[:, hid:2 * hid]
        v = qkv[:, 2 * hid:3 * hid]

        # Compile-time masks (part of the single constants DMA).
        head_mask = c_ref[r_hmask:r_hmask + cols, :][:, 0:hid]       # (cols, hid) 0/1
        batch_mask = c_ref[r_bmask:r_bmask + rows, :][:, 0:cols]     # (rows, cols) 0/-1e30

        # Head-major replication + block-diagonal head masking (whole batch).
        k_exp = jnp.concatenate([k] * nhead, axis=0) * head_mask     # (cols, hid)
        v_exp = jnp.concatenate([v] * nhead, axis=0) * head_mask     # (cols, hid)

        # ONE scores matmul for every (head, batch) pair.
        s = jax.lax.dot_general(q, k_exp, (((1,), (1,)), ((), ())),
                                preferred_element_type=jnp.float32)  # (rows, cols)
        # Additive cross-batch mask BEFORE the row max.
        s = s + batch_mask

        # Row-global max: constant within each head segment -> valid shift.
        m = jnp.max(s, axis=-1, keepdims=True)
        p = jnp.exp(s - m)                 # cross-batch entries become exactly 0

        # Per-head softmax denominator broadcast to that head's output lanes,
        # and the unnormalized P @ V, one tiny matmul each (all heads+batches).
        denom = jnp.dot(p, head_mask, preferred_element_type=jnp.float32)  # (rows, hid)
        o_un = jnp.dot(p, v_exp, preferred_element_type=jnp.float32)       # (rows, hid)
        attn = o_un * pl.reciprocal(denom, approx=False)                   # (rows, hid)

        # Out-projection, padded to 128 lanes -> lane-dense final store.
        out = (jnp.dot(attn, c_ref[r_wo:r_wo + hid, :],
                       preferred_element_type=jnp.float32)
               + c_ref[r_bias + 1:r_bias + 2, :])                    # (rows, 128)
        out_ref[...] = out.astype(out_ref.dtype)

    return kernel


# ------------------------------- wrapper -----------------------------------
def attention_forward(x, params):
    B, S, F = x.shape
    H = HID
    scale = 1.0 / math.sqrt(HEAD_DIM)
    rows, cols, r_wo, r_bias, r_hmask, r_bmask, total = _const_layout(
        F, H, B, S, NHEAD)

    # ---- constant-weight folding (wrapper-side, weights only) -------------
    # (x @ Wq.T + bq) @ Wiq.T + biq == x @ (Wiq @ Wq).T + (bq @ Wiq.T + biq)
    # The 1/sqrt(head_dim) scale is folded into the q branch.
    w_eff_q = (params["wiq"] @ params["wq"]) * scale                 # (H, F)
    w_eff_k = params["wik"] @ params["wk"]
    w_eff_v = params["wiv"] @ params["wv"]
    b_eff_q = (params["bq"] @ params["wiq"].T + params["biq"]) * scale   # (1, H)
    b_eff_k = params["bk"] @ params["wik"].T + params["bik"]
    b_eff_v = params["bv"] @ params["wiv"].T + params["biv"]

    wqkv = jnp.concatenate([w_eff_q, w_eff_k, w_eff_v], axis=0).T    # (F, 3H)
    bqkv = jnp.concatenate([b_eff_q, b_eff_k, b_eff_v], axis=1)      # (1, 3H)

    # ---- compile-time masks ------------------------------------------------
    head_mask_np = np.kron(np.eye(NHEAD, dtype=np.float32),
                           np.ones((rows, HEAD_DIM), dtype=np.float32))  # (cols, H)
    q_b = np.arange(rows)[:, None] // S
    k_b = (np.arange(cols)[None, :] % rows) // S
    batch_mask_np = np.where(q_b == k_b, 0.0, -1e30).astype(np.float32)  # (rows, cols)

    # ---- pack everything into ONE lane-dense constants slab ----------------
    base = np.zeros((total, LANES), np.float32)
    base[r_hmask:r_hmask + cols, 0:H] = head_mask_np
    base[r_bmask:r_bmask + rows, 0:cols] = batch_mask_np
    consts = jnp.asarray(base)
    consts = consts.at[0:F, 0:3 * H].set(wqkv)
    consts = consts.at[r_wo:r_wo + H, 0:H].set(params["wo"].T)
    consts = consts.at[r_bias, 0:3 * H].set(bqkv[0])
    consts = consts.at[r_bias + 1, 0:H].set(params["bo"][0])

    # Flatten batch into the sublane (M) dimension; single kernel invocation,
    # two input DMAs (x + constants slab), lane-dense output.
    x2d = x.reshape(B * S, F)

    kernel = make_attention_kernel(B, S, NHEAD, H, F)
    out2d = pl.pallas_call(
        kernel,
        out_shape=jax.ShapeDtypeStruct((B * S, LANES), jnp.float32),
    )(x2d, consts)

    return out2d[:, :H].reshape(B, S, H)


# ---------------------- pure-JAX reference (for check) ---------------------
def attention_reference(x, p):
    def lin(a, w, b):
        return a @ w.T + b
    q = lin(x, p["wq"], p["bq"])
    k = lin(x, p["wk"], p["bk"])
    v = lin(x, p["wv"], p["bv"])
    q2 = lin(q, p["wiq"], p["biq"])
    k2 = lin(k, p["wik"], p["bik"])
    v2 = lin(v, p["wiv"], p["biv"])
    B, S, H = q2.shape
    d = H // NHEAD
    qh = q2.reshape(B, S, NHEAD, d).transpose(0, 2, 1, 3)
    kh = k2.reshape(B, S, NHEAD, d).transpose(0, 2, 1, 3)
    vh = v2.reshape(B, S, NHEAD, d).transpose(0, 2, 1, 3)
    s = jnp.einsum("bhqd,bhkd->bhqk", qh, kh) / math.sqrt(d)
    a = jax.nn.softmax(s, axis=-1)
    o = jnp.einsum("bhqk,bhkd->bhqd", a, vh)
    o = o.transpose(0, 2, 1, 3).reshape(B, S, H)
    return lin(o, p["wo"], p["bo"])


# --------------------------- parameter init --------------------------------
def init_params(key):
    ks = jax.random.split(key, 16)

    def uniform(k, shape, fan_in):
        bound = 1.0 / math.sqrt(fan_in)
        return jax.random.uniform(k, shape, jnp.float32, -bound, bound)

    return {
        # query/key/value nn.Linear(FEAT, HID)
        "wq": uniform(ks[0], (HID, FEAT), FEAT),
        "bq": uniform(ks[1], (1, HID), FEAT),
        "wk": uniform(ks[2], (HID, FEAT), FEAT),
        "bk": uniform(ks[3], (1, HID), FEAT),
        "wv": uniform(ks[4], (HID, FEAT), FEAT),
        "bv": uniform(ks[5], (1, HID), FEAT),
        # MultiheadAttention in_proj (3E x E) split into q/k/v blocks
        "wiq": uniform(ks[6], (HID, HID), HID),
        "wik": uniform(ks[7], (HID, HID), HID),
        "wiv": uniform(ks[8], (HID, HID), HID),
        "biq": uniform(ks[9], (1, HID), HID),
        "bik": uniform(ks[10], (1, HID), HID),
        "biv": uniform(ks[11], (1, HID), HID),
        # out_proj
        "wo": uniform(ks[12], (HID, HID), HID),
        "bo": uniform(ks[13], (1, HID), HID),
    }


# --------------------------------- main -------------------------------------
if __name__ == "__main__":
    key = jax.random.PRNGKey(0)
    kx, kp = jax.random.split(key)
    x = jax.random.normal(kx, (BATCH, SEQ, FEAT), jnp.float32)
    params = init_params(kp)

    fwd = jax.jit(attention_forward)
    out = jax.block_until_ready(fwd(x, params))

    ref = attention_reference(x, params)
    # Weight folding reassociates f32 sums; keep a small tolerance margin.
    np.testing.assert_allclose(np.asarray(out), np.asarray(ref), rtol=1e-3, atol=1e-3)

    print("KERNEL_OK")
</pallas_src>

<mosaic_0001>
module attributes {stable_mosaic.version = 11 : i64} {
  func.func @kernel(%arg0: memref<16x16xf32, #tpu.memory_space<vmem>>, %arg1: memref<136x128xf32, #tpu.memory_space<vmem>>, %arg2: memref<16x128xf32, #tpu.memory_space<vmem>>) attributes {dimension_semantics = [], scalar_prefetch = 0 : i64, scratch_operands = 0 : i64, tpu.core_type = #tpu.core_type<tc>} {
    %c0 = arith.constant 0 : index
    %c0_0 = arith.constant 0 : index
    %0 = vector.load %arg0[%c0, %c0_0] : memref<16x16xf32, #tpu.memory_space<vmem>>, vector<16x16xf32>
    %c0_1 = arith.constant 0 : index
    %c0_2 = arith.constant 0 : index
    %1 = vector.load %arg1[%c0_1, %c0_2] : memref<136x128xf32, #tpu.memory_space<vmem>>, vector<16x128xf32>
    %cst = arith.constant dense<0.000000e+00> : vector<16x128xf32>
    %2 = tpu.matmul %0, %1, %cst {dimension_numbers = #tpu.dot_dimension_numbers<[1], [0], [0], [1], [0, 0, 1, 1], [], []>} : vector<16x16xf32>, vector<16x128xf32>, vector<16x128xf32> -> vector<16x128xf32>
    %c48 = arith.constant 48 : index
    %c0_3 = arith.constant 0 : index
    %3 = vector.load %arg1[%c48, %c0_3] : memref<136x128xf32, #tpu.memory_space<vmem>>, vector<1x128xf32>
    %4 = vector.broadcast %3 : vector<1x128xf32> to vector<16x128xf32>
    %5 = arith.addf %2, %4 : vector<16x128xf32>
    %6 = vector.extract_strided_slice %5 {offsets = [0, 0], sizes = [16, 32], strides = [1, 1]} : vector<16x128xf32> to vector<16x32xf32>
    %7 = vector.extract_strided_slice %5 {offsets = [0, 32], sizes = [16, 32], strides = [1, 1]} : vector<16x128xf32> to vector<16x32xf32>
    %8 = vector.extract_strided_slice %5 {offsets = [0, 64], sizes = [16, 32], strides = [1, 1]} : vector<16x128xf32> to vector<16x32xf32>
    %c56 = arith.constant 56 : index
    %c0_4 = arith.constant 0 : index
    %9 = vector.load %arg1[%c56, %c0_4] : memref<136x128xf32, #tpu.memory_space<vmem>>, vector<64x128xf32>
    %10 = vector.extract_strided_slice %9 {offsets = [0, 0], sizes = [64, 32], strides = [1, 1]} : vector<64x128xf32> to vector<64x32xf32>
    %c120 = arith.constant 120 : index
    %c0_5 = arith.constant 0 : index
    %11 = vector.load %arg1[%c120, %c0_5] : memref<136x128xf32, #tpu.memory_space<vmem>>, vector<16x128xf32>
    %12 = vector.extract_strided_slice %11 {offsets = [0, 0], sizes = [16, 64], strides = [1, 1]} : vector<16x128xf32> to vector<16x64xf32>
    %13 = tpu.concatenate %7, %7, %7, %7 in 0 : vector<16x32xf32>, vector<16x32xf32>, vector<16x32xf32>, vector<16x32xf32> -> vector<64x32xf32>
    %14 = arith.mulf %13, %10 : vector<64x32xf32>
    %15 = tpu.concatenate %8, %8, %8, %8 in 0 : vector<16x32xf32>, vector<16x32xf32>, vector<16x32xf32>, vector<16x32xf32> -> vector<64x32xf32>
    %16 = arith.mulf %15, %10 : vector<64x32xf32>
    %cst_6 = arith.constant dense<0.000000e+00> : vector<16x64xf32>
    %17 = tpu.matmul %6, %14, %cst_6 {dimension_numbers = #tpu.dot_dimension_numbers<[1], [1], [0], [0], [0, 0, 1, 0], [], []>} : vector<16x32xf32>, vector<64x32xf32>, vector<16x64xf32> -> vector<16x64xf32>
    %18 = arith.addf %17, %12 : vector<16x64xf32>
    %cst_7 = arith.constant dense<0xFF800000> : vector<16xf32>
    %19 = vector.multi_reduction <maximumf>, %18, %cst_7 [1] : vector<16x64xf32> to vector<16xf32>
    %20 = vector.shape_cast %19 : vector<16xf32> to vector<16x1xf32>
    %21 = vector.broadcast %20 : vector<16x1xf32> to vector<16x64xf32>
    %22 = arith.subf %18, %21 : vector<16x64xf32>
    %23 = math.exp %22 : vector<16x64xf32>
    %cst_8 = arith.constant dense<0.000000e+00> : vector<16x32xf32>
    %24 = tpu.matmul %23, %10, %cst_8 {dimension_numbers = #tpu.dot_dimension_numbers<[1], [0], [0], [1], [0, 0, 1, 1], [], []>} : vector<16x64xf32>, vector<64x32xf32>, vector<16x32xf32> -> vector<16x32xf32>
    %cst_9 = arith.constant dense<0.000000e+00> : vector<16x32xf32>
    %25 = tpu.matmul %23, %16, %cst_9 {dimension_numbers = #tpu.dot_dimension_numbers<[1], [0], [0], [1], [0, 0, 1, 1], [], []>} : vector<16x64xf32>, vector<64x32xf32>, vector<16x32xf32> -> vector<16x32xf32>
    %26 = tpu.reciprocal %24 : vector<16x32xf32> -> vector<16x32xf32>
    %27 = arith.mulf %25, %26 : vector<16x32xf32>
    %c16 = arith.constant 16 : index
    %c0_10 = arith.constant 0 : index
    %28 = vector.load %arg1[%c16, %c0_10] : memref<136x128xf32, #tpu.memory_space<vmem>>, vector<32x128xf32>
    %cst_11 = arith.constant dense<0.000000e+00> : vector<16x128xf32>
    %29 = tpu.matmul %27, %28, %cst_11 {dimension_numbers = #tpu.dot_dimension_numbers<[1], [0], [0], [1], [0, 0, 1, 1], [], []>} : vector<16x32xf32>, vector<32x128xf32>, vector<16x128xf32> -> vector<16x128xf32>
    %c49 = arith.constant 49 : index
    %c0_12 = arith.constant 0 : index
    %30 = vector.load %arg1[%c49, %c0_12] : memref<136x128xf32, #tpu.memory_space<vmem>>, vector<1x128xf32>
    %31 = vector.broadcast %30 : vector<1x128xf32> to vector<16x128xf32>
    %32 = arith.addf %29, %31 : vector<16x128xf32>
    %c0_13 = arith.constant 0 : index
    %c0_14 = arith.constant 0 : index
    %33 = vector.load %arg2[%c0_13, %c0_14] : memref<16x128xf32, #tpu.memory_space<vmem>>, vector<16x128xf32>
    tpu.vector_store %arg2[%c0_13, %c0_14], %32 {strides = array<i32>} : memref<16x128xf32, #tpu.memory_space<vmem>>, vector<16x128xf32>,
    return
  }
}

</mosaic_0001>

<llo_original>
// kernel: attention_forward.1
$region0: #{attention_forward.1}
  #allocation0 [shape = 'u32[]', space=smem, size = 0x4, offset = 0x4, fixed_abs, tag = 'smem constant byte address 0x4 - core index']
  #allocation1 [shape = 'u32[72,128]{1,0:T(1,128)}', space=vmem, size = 0x9000, scoped, tag = 'internal scratch']
  %s0 = inlined_call_operand.vmem [shape: f32[16,16], index: 0, kind: input, shape index: {}]
  %s1 = inlined_call_operand.vmem [shape: f32[136,128], index: 1, kind: input, shape index: {}]
  %s2 = inlined_call_operand.vmem [shape: f32[16,128], index: 2, kind: output, shape index: {}]
  %s3 = sld [smem:[#allocation0]]
  $region18: #{attention_forward.1} parent=0
    _
  %s5 = ssub.s32 1, %s3
  %s6 = scalar_select 0, %s5, %s3
  // Predicated region
  $region2: #{attention_forward.1} parent=0 // pred_check
    _
  $region3: #{attention_forward.1} parent=0 // pred_check_branch
    %8 = sbr.rel (0) target = $region5
  $region4: #{attention_forward.1} parent=0 // pred_region
    _
  $region5: #{attention_forward.1} parent=0 // pred_fallthru
    _
  // Predicated region
  $region6: #{attention_forward.1} parent=0 // pred_check
    _
  $region7: #{attention_forward.1} parent=0 // pred_check_branch
    %10 = sbr.rel (0) target = $region9
  $region8: #{attention_forward.1} parent=0 // pred_region
    _
  $region9: #{attention_forward.1} parent=0 // pred_fallthru
    _
  %v11 = vld [vmem:[%s0] sm:$0xff]
  %v12 = vld [vmem:[%s0 + $0x8] sm:$0xff]
  %v13 = vld [vmem:[%s1] sm:$0xff]
  %v14 = vld [vmem:[%s1 + $0x8] sm:$0xff]
  %v15 = vld [vmem:[%s1 + $0x30] sm:$0x1]
  %v16 = vperm.slane %v15, 0
  %vm17 = vcmask 130048
  %v19 = vsel %vm17, %v11, 0
  %v22 = vsel %vm17, %v12, 0
  %24 = vmatpush.msra.mxu0 0.0
  %25 = vmatpush.msra.mxu0 0.0
  %26 = vmatpush.msra.mxu0 0.0
  %27 = vmatpush.msra.mxu0 0.0
  %28 = vmatpush.msra.mxu0 0.0
  %29 = vmatpush.msra.mxu0 0.0
  %30 = vmatpush.msra.mxu0 0.0
  %31 = vmatpush.msra.mxu0 0.0
  %32 = vmatpush.msra.mxu0 0.0
  %33 = vmatpush.msra.mxu0 0.0
  %34 = vmatpush.msra.mxu0 0.0
  %35 = vmatpush.msra.mxu0 0.0
  %36 = vmatpush.msra.mxu0 0.0
  %37 = vmatpush.msra.mxu0 0.0
  %38 = vmatpush.msra.mxu0 %v14
  %39 = vmatpush.msra.mxu0 %v13
  %40 = vmatmul.f32.gmra.mxu0 %v19
  %v41 = vpop.f32.mrf.mxu0
  %v42 = vadd.f32 %v16, %v41
  %43 = vmatmul.f32.gmra.mxu0 %v22
  %v44 = vpop.f32.mrf.mxu0
  %v45 = vadd.f32 %v16, %v44
  %46 = vdwg.mxu0
  %v47 = vld [vmem:[%s1 + $0x38] sm:$0xff]
  %v48 = vld [vmem:[%s1 + $0x40] sm:$0xff]
  %v49 = vld [vmem:[%s1 + $0x48] sm:$0xff]
  %v50 = vld [vmem:[%s1 + $0x50] sm:$0xff]
  %v51 = vld [vmem:[%s1 + $0x58] sm:$0xff]
  %v52 = vld [vmem:[%s1 + $0x60] sm:$0xff]
  %v53 = vld [vmem:[%s1 + $0x68] sm:$0xff]
  %v54 = vld [vmem:[%s1 + $0x70] sm:$0xff]
  %v55 = vld [vmem:[%s1 + $0x78] sm:$0xff]
  %v56 = vld [vmem:[%s1 + $0x80] sm:$0xff]
  %65 = vrot.lane.b32.xlu0 %v47, 32
  %v66 = vpop.permute.xlu0 %65
  %67 = vrot.lane.b32.xlu0 %v48, 32
  %v68 = vpop.permute.xlu0 %67
  %69 = vrot.lane.b32.xlu0 %v49, 32
  %v70 = vpop.permute.xlu0 %69
  %71 = vrot.lane.b32.xlu0 %v50, 32
  %v72 = vpop.permute.xlu0 %71
  %73 = vrot.lane.b32.xlu0 %v51, 32
  %v74 = vpop.permute.xlu0 %73
  %75 = vrot.lane.b32.xlu0 %v52, 32
  %v76 = vpop.permute.xlu0 %75
  %77 = vrot.lane.b32.xlu0 %v53, 32
  %v78 = vpop.permute.xlu0 %77
  %79 = vrot.lane.b32.xlu0 %v54, 32
  %v80 = vpop.permute.xlu0 %79
  %v89 = vmul.f32 %v42, %v66
  %v90 = vmul.f32 %v45, %v68
  %v91 = vmul.f32 %v42, %v70
  %v92 = vmul.f32 %v45, %v72
  %v93 = vmul.f32 %v42, %v74
  %v94 = vmul.f32 %v45, %v76
  %v95 = vmul.f32 %v42, %v78
  %v96 = vmul.f32 %v45, %v80
  %97 = vrot.lane.b32.xlu0 %v47, 64
  %v98 = vpop.permute.xlu0 %97
  %99 = vrot.lane.b32.xlu0 %v48, 64
  %v100 = vpop.permute.xlu0 %99
  %101 = vrot.lane.b32.xlu0 %v49, 64
  %v102 = vpop.permute.xlu0 %101
  %103 = vrot.lane.b32.xlu0 %v50, 64
  %v104 = vpop.permute.xlu0 %103
  %105 = vrot.lane.b32.xlu0 %v51, 64
  %v106 = vpop.permute.xlu0 %105
  %107 = vrot.lane.b32.xlu0 %v52, 64
  %v108 = vpop.permute.xlu0 %107
  %109 = vrot.lane.b32.xlu0 %v53, 64
  %v110 = vpop.permute.xlu0 %109
  %111 = vrot.lane.b32.xlu0 %v54, 64
  %v112 = vpop.permute.xlu0 %111
  %v121 = vmul.f32 %v42, %v98
  %v122 = vmul.f32 %v45, %v100
  %v123 = vmul.f32 %v42, %v102
  %v124 = vmul.f32 %v45, %v104
  %v125 = vmul.f32 %v42, %v106
  %v126 = vmul.f32 %v45, %v108
  %v127 = vmul.f32 %v42, %v110
  %v128 = vmul.f32 %v45, %v112
  %137 = vrot.lane.b32.xlu0 %v89, 96
  %v138 = vpop.permute.xlu0 %137
  %139 = vrot.lane.b32.xlu0 %v90, 96
  %v140 = vpop.permute.xlu0 %139
  %141 = vrot.lane.b32.xlu0 %v91, 96
  %v142 = vpop.permute.xlu0 %141
  %143 = vrot.lane.b32.xlu0 %v92, 96
  %v144 = vpop.permute.xlu0 %143
  %145 = vrot.lane.b32.xlu0 %v93, 96
  %v146 = vpop.permute.xlu0 %145
  %147 = vrot.lane.b32.xlu0 %v94, 96
  %v148 = vpop.permute.xlu0 %147
  %149 = vrot.lane.b32.xlu0 %v95, 96
  %v150 = vpop.permute.xlu0 %149
  %151 = vrot.lane.b32.xlu0 %v96, 96
  %v152 = vpop.permute.xlu0 %151
  %vm153 = vcmask 261120
  %v155 = vsel %vm153, %v42, 0
  %v158 = vsel %vm153, %v45, 0
  %v160 = vsel %vm153, %v138, 0
  %v162 = vsel %vm153, %v140, 0
  %v164 = vsel %vm153, %v142, 0
  %v166 = vsel %vm153, %v144, 0
  %v168 = vsel %vm153, %v146, 0
  %v170 = vsel %vm153, %v148, 0
  %v172 = vsel %vm153, %v150, 0
  %v174 = vsel %vm153, %v152, 0
  %176 = vmatpush.xpose.msra.mxu0 0.0
  %177 = vmatpush.xpose.msra.mxu0 0.0
  %178 = vmatpush.xpose.msra.mxu0 0.0
  %179 = vmatpush.xpose.msra.mxu0 0.0
  %180 = vmatpush.xpose.msra.mxu0 0.0
  %181 = vmatpush.xpose.msra.mxu0 0.0
  %182 = vmatpush.xpose.msra.mxu0 0.0
  %183 = vmatpush.xpose.msra.mxu0 0.0
  %184 = vmatpush.xpose.msra.mxu0 %v174
  %185 = vmatpush.xpose.msra.mxu0 %v172
  %186 = vmatpush.xpose.msra.mxu0 %v170
  %187 = vmatpush.xpose.msra.mxu0 %v168
  %188 = vmatpush.xpose.msra.mxu0 %v166
  %189 = vmatpush.xpose.msra.mxu0 %v164
  %190 = vmatpush.xpose.msra.mxu0 %v162
  %191 = vmatpush.xpose.msra.mxu0 %v160
  %192 = vmatmul.f32.gmra.mxu0 %v155
  %v193 = vpop.f32.mrf.mxu0
  %v194 = vadd.f32 %v55, %v193
  %195 = vmatmul.f32.gmra.mxu0 %v158
  %v196 = vpop.f32.mrf.mxu0
  %v197 = vadd.f32 %v56, %v196
  %198 = vdwg.mxu0
  %vm199 = vcmask 523264
  %v200 = vsel %vm199, %v194, -inf
  %201 = vmax.xlane.f32.xlu0 %v200
  %v202 = vpop.xlane.xlu0 %201
  %v203 = vsel %vm199, %v197, -inf
  %204 = vmax.xlane.f32.xlu0 %v203
  %v205 = vpop.xlane.xlu0 %204
  %v206 = vsub.f32 %v194, %v202
  %v207 = vsub.f32 %v197, %v205
  %v208 = vmul.f32 %v206, 1.442695
  %v209 = vpow.pop %v208
  %v210 = vmul.f32 %v207, 1.442695
  %v211 = vpow.pop %v210
  %v213 = vsel %vm199, %v209, 0
  %v216 = vsel %vm199, %v211, 0
  %218 = vmatpush.msra.mxu0 0.0
  %219 = vmatpush.msra.mxu0 0.0
  %220 = vmatpush.msra.mxu0 0.0
  %221 = vmatpush.msra.mxu0 0.0
  %222 = vmatpush.msra.mxu0 0.0
  %223 = vmatpush.msra.mxu0 0.0
  %224 = vmatpush.msra.mxu0 0.0
  %225 = vmatpush.msra.mxu0 0.0
  %226 = vmatpush.msra.mxu0 %v54
  %227 = vmatpush.msra.mxu0 %v53
  %228 = vmatpush.msra.mxu0 %v52
  %229 = vmatpush.msra.mxu0 %v51
  %230 = vmatpush.msra.mxu0 %v50
  %231 = vmatpush.msra.mxu0 %v49
  %232 = vmatpush.msra.mxu0 %v48
  %233 = vmatpush.msra.mxu0 %v47
  %234 = vmatmul.f32.gmra.mxu0 %v213
  %v235 = vpop.f32.mrf.mxu0
  %v236 = vadd.f32 0.0, %v235
  %237 = vmatmul.f32.gmra.mxu0 %v216
  %v238 = vpop.f32.mrf.mxu0
  %v239 = vadd.f32 0.0, %v238
  %240 = vdwg.mxu0
  %249 = vrot.lane.b32.xlu0 %v121, 64
  %v250 = vpop.permute.xlu0 %249
  %251 = vrot.lane.b32.xlu0 %v122, 64
  %v252 = vpop.permute.xlu0 %251
  %253 = vrot.lane.b32.xlu0 %v123, 64
  %v254 = vpop.permute.xlu0 %253
  %255 = vrot.lane.b32.xlu0 %v124, 64
  %v256 = vpop.permute.xlu0 %255
  %257 = vrot.lane.b32.xlu0 %v125, 64
  %v258 = vpop.permute.xlu0 %257
  %259 = vrot.lane.b32.xlu0 %v126, 64
  %v260 = vpop.permute.xlu0 %259
  %261 = vrot.lane.b32.xlu0 %v127, 64
  %v262 = vpop.permute.xlu0 %261
  %263 = vrot.lane.b32.xlu0 %v128, 64
  %v264 = vpop.permute.xlu0 %263
  %273 = vmatpush.msra.mxu0 0.0
  %274 = vmatpush.msra.mxu0 0.0
  %275 = vmatpush.msra.mxu0 0.0
  %276 = vmatpush.msra.mxu0 0.0
  %277 = vmatpush.msra.mxu0 0.0
  %278 = vmatpush.msra.mxu0 0.0
  %279 = vmatpush.msra.mxu0 0.0
  %280 = vmatpush.msra.mxu0 0.0
  %281 = vmatpush.msra.mxu0 %v264
  %282 = vmatpush.msra.mxu0 %v262
  %283 = vmatpush.msra.mxu0 %v260
  %284 = vmatpush.msra.mxu0 %v258
  %285 = vmatpush.msra.mxu0 %v256
  %286 = vmatpush.msra.mxu0 %v254
  %287 = vmatpush.msra.mxu0 %v252
  %288 = vmatpush.msra.mxu0 %v250
  %289 = vmatmul.f32.gmra.mxu0 %v213
  %v290 = vpop.f32.mrf.mxu0
  %v291 = vadd.f32 0.0, %v290
  %292 = vmatmul.f32.gmra.mxu0 %v216
  %v293 = vpop.f32.mrf.mxu0
  %v294 = vadd.f32 0.0, %v293
  %295 = vdwg.mxu0
  %v296 = vrcp.pop %v236
  %v297 = vmul.f32 %v236, %v296
  %v298 = vsub.f32 1.0, %v297
  %v299 = vmul.f32 %v296, %v298
  %v300 = vadd.f32 %v296, %v299
  %vm301 = vweird.f32 %v236
  %vm302 = vweird.f32 %v296
  %vm303 = vmor %vm301, %vm302
  %v304 = vsel %vm303, %v296, %v300
  %v305 = vand.u32 2147483647, %v236
  %vm306 = vcmp.eq.f32.partialorder %v305, 8.507059e+37
  %v307 = vand.u32 %v236, 2147483648
  %v308 = vor.u32 1.1754944e-38, %v307
  %v309 = vsel %vm306, %v308, %v304
  %v310 = vrcp.pop %v239
  %v311 = vmul.f32 %v239, %v310
  %v312 = vsub.f32 1.0, %v311
  %v313 = vmul.f32 %v310, %v312
  %v314 = vadd.f32 %v310, %v313
  %vm315 = vweird.f32 %v239
  %vm316 = vweird.f32 %v310
  %vm317 = vmor %vm315, %vm316
  %v318 = vsel %vm317, %v310, %v314
  %v319 = vand.u32 2147483647, %v239
  %vm320 = vcmp.eq.f32.partialorder %v319, 8.507059e+37
  %v321 = vand.u32 %v239, 2147483648
  %v322 = vor.u32 1.1754944e-38, %v321
  %v323 = vsel %vm320, %v322, %v318
  %v324 = vmul.f32 %v291, %v309
  %v325 = vmul.f32 %v294, %v323
  %v326 = vld [vmem:[%s1 + $0x10] sm:$0xff]
  %v327 = vld [vmem:[%s1 + $0x18] sm:$0xff]
  %v328 = vld [vmem:[%s1 + $0x20] sm:$0xff]
  %v329 = vld [vmem:[%s1 + $0x28] sm:$0xff]
  %v330 = vld [vmem:[%s1 + $0x31] sm:$0x1]
  %v331 = vperm.slane %v330, 0
  %v333 = vsel %vm153, %v324, 0
  %v336 = vsel %vm153, %v325, 0
  %338 = vmatpush.msra.mxu0 0.0
  %339 = vmatpush.msra.mxu0 0.0
  %340 = vmatpush.msra.mxu0 0.0
  %341 = vmatpush.msra.mxu0 0.0
  %342 = vmatpush.msra.mxu0 0.0
  %343 = vmatpush.msra.mxu0 0.0
  %344 = vmatpush.msra.mxu0 0.0
  %345 = vmatpush.msra.mxu0 0.0
  %346 = vmatpush.msra.mxu0 0.0
  %347 = vmatpush.msra.mxu0 0.0
  %348 = vmatpush.msra.mxu0 0.0
  %349 = vmatpush.msra.mxu0 0.0
  %350 = vmatpush.msra.mxu0 %v329
  %351 = vmatpush.msra.mxu0 %v328
  %352 = vmatpush.msra.mxu0 %v327
  %353 = vmatpush.msra.mxu0 %v326
  %354 = vmatmul.f32.gmra.mxu0 %v333
  %v355 = vpop.f32.mrf.mxu0
  %v356 = vadd.f32 %v331, %v355
  %357 = vmatmul.f32.gmra.mxu0 %v336
  %v358 = vpop.f32.mrf.mxu0
  %v359 = vadd.f32 %v331, %v358
  %360 = vdwg.mxu0
  %361 = vst [vmem:[%s2] sm:$0xff] %v356
  %362 = vst [vmem:[%s2 + $0x8] sm:$0xff] %v359
  // Predicated region
  $region10: #{attention_forward.1} parent=0 // pred_check
    _
  $region11: #{attention_forward.1} parent=0 // pred_check_branch
    %364 = sbr.rel (0) target = $region13
  $region12: #{attention_forward.1} parent=0 // pred_region
    _
  $region13: #{attention_forward.1} parent=0 // pred_fallthru
    _
  // Predicated region
  $region14: #{attention_forward.1} parent=0 // pred_check
    _
  $region15: #{attention_forward.1} parent=0 // pred_check_branch
    %366 = sbr.rel (0) target = $region17
  $region16: #{attention_forward.1} parent=0 // pred_region
    _
  $region17: #{attention_forward.1} parent=0 // pred_fallthru
    _

</llo_original>
